<compile_context>
chip_gen: v7x
topology: tpu7x:2x2x1
jax: 0.10.0
libtpu: 0.0.40
codegen_flags: <defaults>
</compile_context>

<pallas_src>
import jax
import jax.numpy as jnp
from jax.experimental import pallas as pl
from jax.experimental.pallas import tpu as pltpu

HIDDEN = 128      # hidden width of the DQN (matches nn.Linear(…, 128))
IN_PAD = 8        # fc1 contraction dim padded to the 8-sublane tile
OUT_PAD = 128     # fc3 output padded to a full 128-lane vreg (lane-dense stores)


def dqn_kernel(x_ref, w1_ref, b1_ref, w2_ref, b2_ref, w3_ref, b3_ref, o_ref):
    # fc1 + relu  (bf16 operands, f32 accumulation)
    h1 = jnp.dot(x_ref[...], w1_ref[...], preferred_element_type=jnp.float32)
    h1 = jnp.maximum(h1 + b1_ref[...], 0.0)
    # fc2 + relu
    h2 = jnp.dot(h1.astype(jnp.bfloat16), w2_ref[...],
                 preferred_element_type=jnp.float32)
    h2 = jnp.maximum(h2 + b2_ref[...], 0.0)
    # fc3 (no activation), lane-dense (TB, 128) store
    out = jnp.dot(h2.astype(jnp.bfloat16), w3_ref[...],
                  preferred_element_type=jnp.float32)
    o_ref[...] = (out + b3_ref[...]).astype(o_ref.dtype)


def init_dqn_params(key, input_size, output_size, hidden=HIDDEN):
    """Deterministic init mimicking nn.Linear default: U(-1/sqrt(fan_in), +)."""
    keys = jax.random.split(key, 6)

    def linear(kw, kb, fan_in, fan_out):
        bound = 1.0 / jnp.sqrt(fan_in)
        w = jax.random.uniform(kw, (fan_in, fan_out), jnp.float32, -bound, bound)
        b = jax.random.uniform(kb, (1, fan_out), jnp.float32, -bound, bound)
        return w, b

    w1, b1 = linear(keys[0], keys[1], input_size, hidden)
    w2, b2 = linear(keys[2], keys[3], hidden, hidden)
    w3, b3 = linear(keys[4], keys[5], hidden, output_size)
    return (w1, b1, w2, b2, w3, b3)


def pad_params_for_kernel(params, in_pad=IN_PAD, out_pad=OUT_PAD):
    """Zero-pad fc1 rows to 8 and fc3 cols to 128; cast weights to bf16."""
    w1, b1, w2, b2, w3, b3 = params
    in_size, hidden = w1.shape
    out_size = w3.shape[1]
    w1p = jnp.zeros((in_pad, hidden), jnp.float32).at[:in_size].set(w1)
    w3p = jnp.zeros((hidden, out_pad), jnp.float32).at[:, :out_size].set(w3)
    b3p = jnp.zeros((1, out_pad), jnp.float32).at[:, :out_size].set(b3)
    return (w1p.astype(jnp.bfloat16), b1,
            w2.astype(jnp.bfloat16), b2,
            w3p.astype(jnp.bfloat16), b3p)


def dqn_forward(x, padded_params, out_size, *, block_batch=256):
    """x: (batch, input_size) f32.  Returns (batch, out_size) f32 Q-values."""
    w1, b1, w2, b2, w3, b3 = padded_params
    batch, in_size = x.shape
    in_pad = w1.shape[0]
    out_pad = w3.shape[1]

    tb = block_batch
    n_blocks = pl.cdiv(batch, tb)
    padded_batch = n_blocks * tb

    # Pad batch to a multiple of the tile and features to the padded fc1 width.
    xp = jnp.zeros((padded_batch, in_pad), jnp.bfloat16)
    xp = xp.at[:batch, :in_size].set(x.astype(jnp.bfloat16))

    # Weights/biases resident across the whole grid (constant index_map).
    resident = lambda shape: pl.BlockSpec(shape, lambda i: (0, 0))

    out_padded = pl.pallas_call(
        dqn_kernel,
        out_shape=jax.ShapeDtypeStruct((padded_batch, out_pad), jnp.float32),
        grid=(n_blocks,),
        in_specs=[
            pl.BlockSpec((tb, in_pad), lambda i: (i, 0)),   # x tile, pipelined
            resident(w1.shape), resident(b1.shape),
            resident(w2.shape), resident(b2.shape),
            resident(w3.shape), resident(b3.shape),
        ],
        out_specs=pl.BlockSpec((tb, out_pad), lambda i: (i, 0)),
        compiler_params=pltpu.CompilerParams(
            dimension_semantics=("parallel",)),
    )(xp, w1, b1, w2, b2, w3, b3)

    return out_padded[:batch, :out_size]


def dqn_reference_f32(x, params):
    """Pure-JAX f32 reference with the original (unpadded) parameters."""
    w1, b1, w2, b2, w3, b3 = params
    h1 = jnp.maximum(x @ w1 + b1, 0.0)
    h2 = jnp.maximum(h1 @ w2 + b2, 0.0)
    return h2 @ w3 + b3


def dqn_reference_bf16(x, padded_params, in_size, out_size):
    """Reference that mirrors the kernel's bf16-operand / f32-accumulate math."""
    w1, b1, w2, b2, w3, b3 = padded_params
    xp = jnp.zeros((x.shape[0], w1.shape[0]), jnp.bfloat16)
    xp = xp.at[:, :in_size].set(x.astype(jnp.bfloat16))
    h1 = jnp.maximum(jnp.dot(xp, w1, preferred_element_type=jnp.float32) + b1, 0.0)
    h2 = jnp.maximum(
        jnp.dot(h1.astype(jnp.bfloat16), w2, preferred_element_type=jnp.float32) + b2, 0.0)
    out = jnp.dot(h2.astype(jnp.bfloat16), w3, preferred_element_type=jnp.float32) + b3
    return out[:, :out_size]


if __name__ == "__main__":
    # DQN on a toy env (CartPole-like): 4 state dims, 2 actions.  Use a
    # replay-buffer sized batch (512) so the grid actually pipelines 2 tiles.
    batch, input_size, output_size = 512, 4, 2

    key = jax.random.PRNGKey(0)
    k_params, k_x = jax.random.split(key)

    params = init_dqn_params(k_params, input_size, output_size)
    padded_params = pad_params_for_kernel(params)
    x = jax.random.normal(k_x, (batch, input_size), jnp.float32)

    q_values = dqn_forward(x, padded_params, output_size)
    q_values = jax.block_until_ready(q_values)

    assert q_values.shape == (batch, output_size)

    # Tight check against a reference using the same bf16/f32 numerics.
    ref_bf16 = dqn_reference_bf16(x, padded_params, input_size, output_size)
    assert jnp.allclose(q_values, ref_bf16, atol=1e-3, rtol=1e-3)

    # Loose check against the pure-f32 PyTorch-equivalent forward pass.
    ref_f32 = dqn_reference_f32(x, params)
    assert jnp.max(jnp.abs(q_values - ref_f32)) < 0.1

    print("KERNEL_OK")
</pallas_src>

<mosaic_0001>
module attributes {stable_mosaic.version = 11 : i64} {
  func.func @dqn_kernel(%arg0: i32, %arg1: memref<256x8xbf16, #tpu.memory_space<vmem>>, %arg2: memref<8x128xbf16, #tpu.memory_space<vmem>>, %arg3: memref<1x128xf32, #tpu.memory_space<vmem>>, %arg4: memref<128x128xbf16, #tpu.memory_space<vmem>>, %arg5: memref<1x128xf32, #tpu.memory_space<vmem>>, %arg6: memref<128x128xbf16, #tpu.memory_space<vmem>>, %arg7: memref<1x128xf32, #tpu.memory_space<vmem>>, %arg8: memref<256x128xf32, #tpu.memory_space<vmem>>) attributes {dimension_semantics = [#tpu.dimension_semantics<parallel>], iteration_bounds = array<i64: 2>, scalar_prefetch = 0 : i64, scratch_operands = 0 : i64, tpu.core_type = #tpu.core_type<tc>, window_params = [{transform_indices = @transform_0, window_bounds = array<i64: 256, 8>}, {pipeline_mode = #tpu.pipeline_mode<synchronous>, transform_indices = @transform_1, window_bounds = array<i64: 8, 128>}, {pipeline_mode = #tpu.pipeline_mode<synchronous>, transform_indices = @transform_2, window_bounds = array<i64: 1, 128>}, {pipeline_mode = #tpu.pipeline_mode<synchronous>, transform_indices = @transform_3, window_bounds = array<i64: 128, 128>}, {pipeline_mode = #tpu.pipeline_mode<synchronous>, transform_indices = @transform_4, window_bounds = array<i64: 1, 128>}, {pipeline_mode = #tpu.pipeline_mode<synchronous>, transform_indices = @transform_5, window_bounds = array<i64: 128, 128>}, {pipeline_mode = #tpu.pipeline_mode<synchronous>, transform_indices = @transform_6, window_bounds = array<i64: 1, 128>}, {transform_indices = @transform_7, window_bounds = array<i64: 256, 128>}]} {
    %c0 = arith.constant 0 : index
    %c0_0 = arith.constant 0 : index
    %0 = vector.load %arg1[%c0, %c0_0] : memref<256x8xbf16, #tpu.memory_space<vmem>>, vector<256x8xbf16>
    %c0_1 = arith.constant 0 : index
    %c0_2 = arith.constant 0 : index
    %1 = vector.load %arg2[%c0_1, %c0_2] : memref<8x128xbf16, #tpu.memory_space<vmem>>, vector<8x128xbf16>
    %cst = arith.constant dense<0.000000e+00> : vector<256x128xf32>
    %2 = tpu.matmul %0, %1, %cst {dimension_numbers = #tpu.dot_dimension_numbers<[1], [0], [0], [1], [0, 0, 1, 1], [], []>} : vector<256x8xbf16>, vector<8x128xbf16>, vector<256x128xf32> -> vector<256x128xf32>
    %c0_3 = arith.constant 0 : index
    %c0_4 = arith.constant 0 : index
    %3 = vector.load %arg3[%c0_3, %c0_4] : memref<1x128xf32, #tpu.memory_space<vmem>>, vector<1x128xf32>
    %4 = vector.broadcast %3 : vector<1x128xf32> to vector<256x128xf32>
    %5 = arith.addf %2, %4 : vector<256x128xf32>
    %cst_5 = arith.constant 0.000000e+00 : f32
    %6 = vector.broadcast %cst_5 : f32 to vector<256x128xf32>
    %7 = arith.maximumf %5, %6 : vector<256x128xf32>
    %8 = arith.truncf %7 : vector<256x128xf32> to vector<256x128xbf16>
    %c0_6 = arith.constant 0 : index
    %c0_7 = arith.constant 0 : index
    %9 = vector.load %arg4[%c0_6, %c0_7] : memref<128x128xbf16, #tpu.memory_space<vmem>>, vector<128x128xbf16>
    %cst_8 = arith.constant dense<0.000000e+00> : vector<256x128xf32>
    %10 = tpu.matmul %8, %9, %cst_8 {dimension_numbers = #tpu.dot_dimension_numbers<[1], [0], [0], [1], [0, 0, 1, 1], [], []>} : vector<256x128xbf16>, vector<128x128xbf16>, vector<256x128xf32> -> vector<256x128xf32>
    %c0_9 = arith.constant 0 : index
    %c0_10 = arith.constant 0 : index
    %11 = vector.load %arg5[%c0_9, %c0_10] : memref<1x128xf32, #tpu.memory_space<vmem>>, vector<1x128xf32>
    %12 = vector.broadcast %11 : vector<1x128xf32> to vector<256x128xf32>
    %13 = arith.addf %10, %12 : vector<256x128xf32>
    %cst_11 = arith.constant 0.000000e+00 : f32
    %14 = vector.broadcast %cst_11 : f32 to vector<256x128xf32>
    %15 = arith.maximumf %13, %14 : vector<256x128xf32>
    %16 = arith.truncf %15 : vector<256x128xf32> to vector<256x128xbf16>
    %c0_12 = arith.constant 0 : index
    %c0_13 = arith.constant 0 : index
    %17 = vector.load %arg6[%c0_12, %c0_13] : memref<128x128xbf16, #tpu.memory_space<vmem>>, vector<128x128xbf16>
    %cst_14 = arith.constant dense<0.000000e+00> : vector<256x128xf32>
    %18 = tpu.matmul %16, %17, %cst_14 {dimension_numbers = #tpu.dot_dimension_numbers<[1], [0], [0], [1], [0, 0, 1, 1], [], []>} : vector<256x128xbf16>, vector<128x128xbf16>, vector<256x128xf32> -> vector<256x128xf32>
    %c0_15 = arith.constant 0 : index
    %c0_16 = arith.constant 0 : index
    %19 = vector.load %arg7[%c0_15, %c0_16] : memref<1x128xf32, #tpu.memory_space<vmem>>, vector<1x128xf32>
    %20 = vector.broadcast %19 : vector<1x128xf32> to vector<256x128xf32>
    %21 = arith.addf %18, %20 : vector<256x128xf32>
    %c0_17 = arith.constant 0 : index
    %c0_18 = arith.constant 0 : index
    %22 = vector.load %arg8[%c0_17, %c0_18] : memref<256x128xf32, #tpu.memory_space<vmem>>, vector<256x128xf32>
    tpu.vector_store %arg8[%c0_17, %c0_18], %21 {strides = array<i32>} : memref<256x128xf32, #tpu.memory_space<vmem>>, vector<256x128xf32>,
    return
  }
  func.func @transform_0(%arg0: i32) -> (i32, i32) {
    %c0_i32 = arith.constant 0 : i32
    %c0_i32_0 = arith.constant 0 : i32
    return %arg0, %c0_i32 : i32, i32
  }
  func.func @transform_1(%arg0: i32) -> (i32, i32) {
    %c0_i32 = arith.constant 0 : i32
    %c0_i32_0 = arith.constant 0 : i32
    %c0_i32_1 = arith.constant 0 : i32
    return %c0_i32, %c0_i32_0 : i32, i32
  }
  func.func @transform_2(%arg0: i32) -> (i32, i32) {
    %c0_i32 = arith.constant 0 : i32
    %c0_i32_0 = arith.constant 0 : i32
    %c0_i32_1 = arith.constant 0 : i32
    return %c0_i32, %c0_i32_0 : i32, i32
  }
  func.func @transform_3(%arg0: i32) -> (i32, i32) {
    %c0_i32 = arith.constant 0 : i32
    %c0_i32_0 = arith.constant 0 : i32
    %c0_i32_1 = arith.constant 0 : i32
    return %c0_i32, %c0_i32_0 : i32, i32
  }
  func.func @transform_4(%arg0: i32) -> (i32, i32) {
    %c0_i32 = arith.constant 0 : i32
    %c0_i32_0 = arith.constant 0 : i32
    %c0_i32_1 = arith.constant 0 : i32
    return %c0_i32, %c0_i32_0 : i32, i32
  }
  func.func @transform_5(%arg0: i32) -> (i32, i32) {
    %c0_i32 = arith.constant 0 : i32
    %c0_i32_0 = arith.constant 0 : i32
    %c0_i32_1 = arith.constant 0 : i32
    return %c0_i32, %c0_i32_0 : i32, i32
  }
  func.func @transform_6(%arg0: i32) -> (i32, i32) {
    %c0_i32 = arith.constant 0 : i32
    %c0_i32_0 = arith.constant 0 : i32
    %c0_i32_1 = arith.constant 0 : i32
    return %c0_i32, %c0_i32_0 : i32, i32
  }
  func.func @transform_7(%arg0: i32) -> (i32, i32) {
    %c0_i32 = arith.constant 0 : i32
    %c0_i32_0 = arith.constant 0 : i32
    return %arg0, %c0_i32 : i32, i32
  }
}

</mosaic_0001>

<llo_original>
// kernel: tpu_custom_call.1
$region0: #{tpu_custom_call.1}
  #allocation0 [shape = 'u32[]', space=smem, size = 0x4, offset = 0x4, fixed_abs, tag = 'smem constant byte address 0x4 - core index']
  #allocation1 [shape = 'u32[144,128]{1,0:T(1,128)}', space=vmem, size = 0x12000, scoped, tag = 'internal scratch']
  %s0 = inlined_call_operand.vmem [shape: bf16[512,8], index: 0, kind: input, shape index: {}]
  %s1 = inlined_call_operand.vmem [shape: bf16[8,128], index: 1, kind: input, shape index: {}]
  %s2 = inlined_call_operand.vmem [shape: f32[1,128], index: 2, kind: input, shape index: {}]
  %s3 = inlined_call_operand.vmem [shape: bf16[128,128], index: 3, kind: input, shape index: {}]
  %s4 = inlined_call_operand.vmem [shape: f32[1,128], index: 4, kind: input, shape index: {}]
  %s5 = inlined_call_operand.vmem [shape: bf16[128,128], index: 5, kind: input, shape index: {}]
  %s6 = inlined_call_operand.vmem [shape: f32[1,128], index: 6, kind: input, shape index: {}]
  %s7 = inlined_call_operand.hbm [shape: f32[512,128], index: 7, kind: output, shape index: {}]
  %s8 = sld [smem:[#allocation0]]
  $region61: #{tpu_custom_call.1} parent=0
    _
  %s10 = ssub.s32 1, %s8
  %s11 = scalar_select 0, %s10, %s8
  $region1: #{tpu_custom_call.1} parent=0
    #allocation2 [shape = 'u8[262144]{0}', space=vmem, size = 0x40000, scoped, tag = 'output window, operand 0']
    #allocation3 [shape = 's32[2]{0}', space=sflag, size = 0x8, scoped, tag = 'scoped memory for tpu_custom_call.1']
    %12 = vsyncpa [#allocation3], 0
    %s13 = scalar_lea.sflag [#allocation3], 1
    %14 = vsyncpa %s13, 0
    loop: start=0, step=1, limit=4
    $region2: #{tpu_custom_call.1} parent=1 // loop_pre_header
      _
    $region3: #{tpu_custom_call.1} parent=1 // loop_header
      %s16 = sphi 0, %s20
      %p17 = scmp.ge.s32.totalorder %s16, 4
      %s26 = sphi 0, %s28
      %s29 = sphi 0, %s26
      %s30 = sphi 0, %s29
      %s46 = sphi 0, %s30
      %s50 = sphi 0, %s50
      %s52 = sphi 0, %s50
      %s53 = sphi 0, %s52
      %s67 = sphi 0, %s53
      %s71 = sphi 0, %s71
      %s73 = sphi 0, %s71
      %s74 = sphi 0, %s73
      %s88 = sphi 0, %s74
      %s92 = sphi 0, %s92
      %s94 = sphi 0, %s92
      %s95 = sphi 0, %s94
      %s109 = sphi 0, %s95
      %s113 = sphi 0, %s113
      %s115 = sphi 0, %s113
      %s116 = sphi 0, %s115
      %s130 = sphi 0, %s116
      %s134 = sphi 0, %s134
      %s136 = sphi 0, %s134
      %s137 = sphi 0, %s136
      %s151 = sphi 0, %s137
      %s155 = sphi 0, %s155
      %s157 = sphi 0, %s155
      %s158 = sphi 0, %s157
      %s172 = sphi 0, %s158
      %s178 = sphi 0, %s180
      %s181 = sphi 0, %s178
      %s182 = sphi 0, %s181
      %s198 = sphi 0, %s182
    $region4: #{tpu_custom_call.1} parent=1 // loop_header_branch
      %19 = sbr.rel (%p17) target = $region8
    $region5: #{tpu_custom_call.1} parent=1 // loop_body
      %s21 = ssub.s32 %s16, 1
      %s22 = ssub.s32 %s16, 2
      %s23 = sadd.s32 %s16, 1
      %s24 = ssub.s32 %s16, %s23
      %p25 = scmp.eq.s32.totalorder %s24, 0
      %s27 = sadd.s32 %s26, 1
      %s28 = scalar_select %p25, %s26, %s27
      %p31 = pneg %p25
      %p32 = scmp.eq.s32.totalorder %s16, 1
      %p33 = por %p31, %p32
      %p34 = scmp.ne.s32.totalorder %s26, %s29
      %p35 = scmp.eq.s32.totalorder %s16, 0
      %p36 = por %p34, %p35
      %p37 = scmp.ne.s32.totalorder %s26, %s29
      %p38 = scmp.eq.s32.totalorder %s21, 1
      %p39 = por %p37, %p38
      %p40 = scmp.ne.s32.totalorder %s29, %s30
      %p41 = scmp.eq.s32.totalorder %s21, 0
      %p42 = por %p40, %p41
      %p43 = scmp.ne.s32.totalorder %s29, %s30
      %p44 = scmp.eq.s32.totalorder %s22, 1
      %p45 = por %p43, %p44
      %p47 = scmp.ne.s32.totalorder %s30, %s46
      %p48 = scmp.eq.s32.totalorder %s22, 0
      %p49 = por %p47, %p48
      %s51 = sadd.s32 %s50, 1
      %p54 = scmp.eq.s32.totalorder %s16, 1
      %p55 = scmp.ne.s32.totalorder %s50, %s52
      %p56 = scmp.eq.s32.totalorder %s16, 0
      %p57 = por %p55, %p56
      %p58 = scmp.ne.s32.totalorder %s50, %s52
      %p59 = scmp.eq.s32.totalorder %s21, 1
      %p60 = por %p58, %p59
      %p61 = scmp.ne.s32.totalorder %s52, %s53
      %p62 = scmp.eq.s32.totalorder %s21, 0
      %p63 = por %p61, %p62
      %p64 = scmp.ne.s32.totalorder %s52, %s53
      %p65 = scmp.eq.s32.totalorder %s22, 1
      %p66 = por %p64, %p65
      %p68 = scmp.ne.s32.totalorder %s53, %s67
      %p69 = scmp.eq.s32.totalorder %s22, 0
      %p70 = por %p68, %p69
      %s72 = sadd.s32 %s71, 1
      %p75 = scmp.eq.s32.totalorder %s16, 1
      %p76 = scmp.ne.s32.totalorder %s71, %s73
      %p77 = scmp.eq.s32.totalorder %s16, 0
      %p78 = por %p76, %p77
      %p79 = scmp.ne.s32.totalorder %s71, %s73
      %p80 = scmp.eq.s32.totalorder %s21, 1
      %p81 = por %p79, %p80
      %p82 = scmp.ne.s32.totalorder %s73, %s74
      %p83 = scmp.eq.s32.totalorder %s21, 0
      %p84 = por %p82, %p83
      %p85 = scmp.ne.s32.totalorder %s73, %s74
      %p86 = scmp.eq.s32.totalorder %s22, 1
      %p87 = por %p85, %p86
      %p89 = scmp.ne.s32.totalorder %s74, %s88
      %p90 = scmp.eq.s32.totalorder %s22, 0
      %p91 = por %p89, %p90
      %s93 = sadd.s32 %s92, 1
      %p96 = scmp.eq.s32.totalorder %s16, 1
      %p97 = scmp.ne.s32.totalorder %s92, %s94
      %p98 = scmp.eq.s32.totalorder %s16, 0
      %p99 = por %p97, %p98
      %p100 = scmp.ne.s32.totalorder %s92, %s94
      %p101 = scmp.eq.s32.totalorder %s21, 1
      %p102 = por %p100, %p101
      %p103 = scmp.ne.s32.totalorder %s94, %s95
      %p104 = scmp.eq.s32.totalorder %s21, 0
      %p105 = por %p103, %p104
      %p106 = scmp.ne.s32.totalorder %s94, %s95
      %p107 = scmp.eq.s32.totalorder %s22, 1
      %p108 = por %p106, %p107
      %p110 = scmp.ne.s32.totalorder %s95, %s109
      %p111 = scmp.eq.s32.totalorder %s22, 0
      %p112 = por %p110, %p111
      %s114 = sadd.s32 %s113, 1
      %p117 = scmp.eq.s32.totalorder %s16, 1
      %p118 = scmp.ne.s32.totalorder %s113, %s115
      %p119 = scmp.eq.s32.totalorder %s16, 0
      %p120 = por %p118, %p119
      %p121 = scmp.ne.s32.totalorder %s113, %s115
      %p122 = scmp.eq.s32.totalorder %s21, 1
      %p123 = por %p121, %p122
      %p124 = scmp.ne.s32.totalorder %s115, %s116
      %p125 = scmp.eq.s32.totalorder %s21, 0
      %p126 = por %p124, %p125
      %p127 = scmp.ne.s32.totalorder %s115, %s116
      %p128 = scmp.eq.s32.totalorder %s22, 1
      %p129 = por %p127, %p128
      %p131 = scmp.ne.s32.totalorder %s116, %s130
      %p132 = scmp.eq.s32.totalorder %s22, 0
      %p133 = por %p131, %p132
      %s135 = sadd.s32 %s134, 1
      %p138 = scmp.eq.s32.totalorder %s16, 1
      %p139 = scmp.ne.s32.totalorder %s134, %s136
      %p140 = scmp.eq.s32.totalorder %s16, 0
      %p141 = por %p139, %p140
      %p142 = scmp.ne.s32.totalorder %s134, %s136
      %p143 = scmp.eq.s32.totalorder %s21, 1
      %p144 = por %p142, %p143
      %p145 = scmp.ne.s32.totalorder %s136, %s137
      %p146 = scmp.eq.s32.totalorder %s21, 0
      %p147 = por %p145, %p146
      %p148 = scmp.ne.s32.totalorder %s136, %s137
      %p149 = scmp.eq.s32.totalorder %s22, 1
      %p150 = por %p148, %p149
      %p152 = scmp.ne.s32.totalorder %s137, %s151
      %p153 = scmp.eq.s32.totalorder %s22, 0
      %p154 = por %p152, %p153
      %s156 = sadd.s32 %s155, 1
      %p159 = scmp.eq.s32.totalorder %s16, 1
      %p160 = scmp.ne.s32.totalorder %s155, %s157
      %p161 = scmp.eq.s32.totalorder %s16, 0
      %p162 = por %p160, %p161
      %p163 = scmp.ne.s32.totalorder %s155, %s157
      %p164 = scmp.eq.s32.totalorder %s21, 1
      %p165 = por %p163, %p164
      %p166 = scmp.ne.s32.totalorder %s157, %s158
      %p167 = scmp.eq.s32.totalorder %s21, 0
      %p168 = por %p166, %p167
      %p169 = scmp.ne.s32.totalorder %s157, %s158
      %p170 = scmp.eq.s32.totalorder %s22, 1
      %p171 = por %p169, %p170
      %p173 = scmp.ne.s32.totalorder %s158, %s172
      %p174 = scmp.eq.s32.totalorder %s22, 0
      %p175 = por %p173, %p174
      %s176 = ssub.s32 %s16, %s23
      %p177 = scmp.eq.s32.totalorder %s176, 0
      %s179 = sadd.s32 %s178, 1
      %s180 = scalar_select %p177, %s178, %s179
      %p183 = pneg %p177
      %p184 = scmp.eq.s32.totalorder %s16, 1
      %p185 = por %p183, %p184
      %p186 = scmp.ne.s32.totalorder %s178, %s181
      %p187 = scmp.eq.s32.totalorder %s16, 0
      %p188 = por %p186, %p187
      %p189 = scmp.ne.s32.totalorder %s178, %s181
      %p190 = scmp.eq.s32.totalorder %s21, 1
      %p191 = por %p189, %p190
      %p192 = scmp.ne.s32.totalorder %s181, %s182
      %p193 = scmp.eq.s32.totalorder %s21, 0
      %p194 = por %p192, %p193
      %p195 = scmp.ne.s32.totalorder %s181, %s182
      %p196 = scmp.eq.s32.totalorder %s22, 1
      %p197 = por %p195, %p196
      %p199 = scmp.ne.s32.totalorder %s182, %s198
      %p200 = scmp.eq.s32.totalorder %s22, 0
      %p201 = por %p199, %p200
      %p202 = scmp.le.s32.totalorder 1, %s16
      %p203 = scmp.lt.s32.totalorder %s16, 3
      %p204 = pnand %p202, %p203
      %p205 = pneg %p204
      // Predicated region
      $region9: #{tpu_custom_call.1} parent=5 // pred_check
        _
      $region10: #{tpu_custom_call.1} parent=5 // pred_check_branch
        %207 = sbr.rel (%p204) target = $region12
      $region11: #{tpu_custom_call.1} parent=5 // pred_region
        %s208 = ssub.s32 %s16, 1
        // Predicated region
        $region13: #{tpu_custom_call.1} parent=11 // pred_check
          %p209 = pneg %p63
        $region14: #{tpu_custom_call.1} parent=11 // pred_check_branch
          %211 = sbr.rel (%p209) target = $region16
        $region15: #{tpu_custom_call.1} parent=11 // pred_region
          _
        $region16: #{tpu_custom_call.1} parent=11 // pred_fallthru
          _
        // Predicated region
        $region17: #{tpu_custom_call.1} parent=11 // pred_check
          %p212 = pneg %p84
        $region18: #{tpu_custom_call.1} parent=11 // pred_check_branch
          %214 = sbr.rel (%p212) target = $region20
        $region19: #{tpu_custom_call.1} parent=11 // pred_region
          _
        $region20: #{tpu_custom_call.1} parent=11 // pred_fallthru
          _
        // Predicated region
        $region21: #{tpu_custom_call.1} parent=11 // pred_check
          %p215 = pneg %p105
        $region22: #{tpu_custom_call.1} parent=11 // pred_check_branch
          %217 = sbr.rel (%p215) target = $region24
        $region23: #{tpu_custom_call.1} parent=11 // pred_region
          _
        $region24: #{tpu_custom_call.1} parent=11 // pred_fallthru
          _
        // Predicated region
        $region25: #{tpu_custom_call.1} parent=11 // pred_check
          %p218 = pneg %p126
        $region26: #{tpu_custom_call.1} parent=11 // pred_check_branch
          %220 = sbr.rel (%p218) target = $region28
        $region27: #{tpu_custom_call.1} parent=11 // pred_region
          _
        $region28: #{tpu_custom_call.1} parent=11 // pred_fallthru
          _
        // Predicated region
        $region29: #{tpu_custom_call.1} parent=11 // pred_check
          %p221 = pneg %p147
        $region30: #{tpu_custom_call.1} parent=11 // pred_check_branch
          %223 = sbr.rel (%p221) target = $region32
        $region31: #{tpu_custom_call.1} parent=11 // pred_region
          _
        $region32: #{tpu_custom_call.1} parent=11 // pred_fallthru
          _
        // Predicated region
        $region33: #{tpu_custom_call.1} parent=11 // pred_check
          %p224 = pneg %p168
        $region34: #{tpu_custom_call.1} parent=11 // pred_check_branch
          %226 = sbr.rel (%p224) target = $region36
        $region35: #{tpu_custom_call.1} parent=11 // pred_region
          _
        $region36: #{tpu_custom_call.1} parent=11 // pred_fallthru
          _
      $region12: #{tpu_custom_call.1} parent=5 // pred_fallthru
        _
      %p227 = scmp.lt.s32.totalorder %s16, 2
      // Predicated region
      $region37: #{tpu_custom_call.1} parent=5 // pred_check
        %p228 = pneg %p227
      $region38: #{tpu_custom_call.1} parent=5 // pred_check_branch
        %230 = sbr.rel (%p228) target = $region40
      $region39: #{tpu_custom_call.1} parent=5 // pred_region
        // Predicated region
        $region41: #{tpu_custom_call.1} parent=39 // pred_check
          %p231 = pneg %p36
        $region42: #{tpu_custom_call.1} parent=39 // pred_check_branch
          %233 = sbr.rel (%p231) target = $region44
        $region43: #{tpu_custom_call.1} parent=39 // pred_region
          %s234 = smul.u32 32, %s16
          %p235 = scmp.lt.s32.totalorder %s234, 63
          %s236 = scalar_select %p235, %s234, 63
          %s237 = smul.addr %s236, 4
          %s238 = scalar_lea.vmem %s0, %s237
          %s239 = smul.u32 32, %s16
        $region44: #{tpu_custom_call.1} parent=39 // pred_fallthru
          _
      $region40: #{tpu_custom_call.1} parent=5 // pred_fallthru
        _
      %p240 = scmp.le.s32.totalorder 1, %s16
      %p241 = scmp.lt.s32.totalorder %s16, 3
      %p242 = pnand %p240, %p241
      %p243 = pneg %p242
      // Predicated region
      $region45: #{tpu_custom_call.1} parent=5 // pred_check
        _
      $region46: #{tpu_custom_call.1} parent=5 // pred_check_branch
        %245 = sbr.rel (%p242) target = $region48
      $region47: #{tpu_custom_call.1} parent=5 // pred_region
        %s246 = ssub.s32 %s16, 1
        %s247 = smul.u32 32, %s21
        %p248 = scmp.lt.s32.totalorder %s247, 63
        %s249 = scalar_select %p248, %s247, 63
        %s250 = smul.addr %s249, 4
        %s251 = scalar_lea.vmem %s0, %s250
        %p252 = pneg %p42
        %p253 = pneg %p39
        %p254 = pneg %p63
        %p255 = pneg %p60
        %p256 = pneg %p84
        %p257 = pneg %p81
        %p258 = pneg %p105
        %p259 = pneg %p102
        %p260 = pneg %p126
        %p261 = pneg %p123
        %p262 = pneg %p147
        %p263 = pneg %p144
        %p264 = pneg %p168
        %p265 = pneg %p165
        %p266 = pneg %p194
        %p267 = pneg %p191
        %s268 = sand.u32 %s181, 1
        %s269 = scalar_lea.sflag [#allocation3], %s268
        %s270 = sand.u32 %s181, 1
        %s271 = smul.addr %s270, 256
        %s272 = scalar_lea.vmem [#allocation2], %s271
        %s273 = smul.u32 32, %s21
        %p274 = scmp.lt.s32.totalorder %s273, 63
        %s275 = scalar_select %p274, %s273, 63
        %s276 = smul.addr %s275, 4
        %s277 = scalar_lea.vmem %s0, %s276
        %s278 = smul.u32 32, %s21
        %s279 = smul.u32 32, %s21
        %v281 = vld [vmem:[%s277] sm:$0xf]
        %v282 = vld [vmem:[%s277 + $0x4] sm:$0xf]
        %v283 = vld [vmem:[%s277 + $0x8] sm:$0xf]
        %v284 = vld [vmem:[%s277 + $0xc] sm:$0xf]
        %v285 = vld [vmem:[%s277 + $0x10] sm:$0xf]
        %v286 = vld [vmem:[%s277 + $0x14] sm:$0xf]
        %v287 = vld [vmem:[%s277 + $0x18] sm:$0xf]
        %v288 = vld [vmem:[%s277 + $0x1c] sm:$0xf]
        %v289 = vld [vmem:[%s277 + $0x20] sm:$0xf]
        %v290 = vld [vmem:[%s277 + $0x24] sm:$0xf]
        %v291 = vld [vmem:[%s277 + $0x28] sm:$0xf]
        %v292 = vld [vmem:[%s277 + $0x2c] sm:$0xf]
        %v293 = vld [vmem:[%s277 + $0x30] sm:$0xf]
        %v294 = vld [vmem:[%s277 + $0x34] sm:$0xf]
        %v295 = vld [vmem:[%s277 + $0x38] sm:$0xf]
        %v296 = vld [vmem:[%s277 + $0x3c] sm:$0xf]
        %v297 = vld [vmem:[%s277 + $0x40] sm:$0xf]
        %v298 = vld [vmem:[%s277 + $0x44] sm:$0xf]
        %v299 = vld [vmem:[%s277 + $0x48] sm:$0xf]
        %v300 = vld [vmem:[%s277 + $0x4c] sm:$0xf]
        %v301 = vld [vmem:[%s277 + $0x50] sm:$0xf]
        %v302 = vld [vmem:[%s277 + $0x54] sm:$0xf]
        %v303 = vld [vmem:[%s277 + $0x58] sm:$0xf]
        %v304 = vld [vmem:[%s277 + $0x5c] sm:$0xf]
        %v305 = vld [vmem:[%s277 + $0x60] sm:$0xf]
        %v306 = vld [vmem:[%s277 + $0x64] sm:$0xf]
        %v307 = vld [vmem:[%s277 + $0x68] sm:$0xf]
        %v308 = vld [vmem:[%s277 + $0x6c] sm:$0xf]
        %v309 = vld [vmem:[%s277 + $0x70] sm:$0xf]
        %v310 = vld [vmem:[%s277 + $0x74] sm:$0xf]
        %v311 = vld [vmem:[%s277 + $0x78] sm:$0xf]
        %v312 = vld [vmem:[%s277 + $0x7c] sm:$0xf]
        %v313 = vld [vmem:[%s1] sm:$0xf]
        %v314 = vld [vmem:[%s2] sm:$0x1]
        %v316 = vlaneseq
        %v317 = vshrl.u32 %v316, 7
        %v318 = vsub.s32 0, %v317
        %v319 = vrot.slane %v314, %v318
        %v353 = vunpack.c.l.b16 %v281
        %v354 = vunpack.c.l.b16 %v282
        %v355 = vunpack.c.l.b16 %v283
        %v356 = vunpack.c.l.b16 %v284
        %v357 = vunpack.c.l.b16 %v285
        %v358 = vunpack.c.l.b16 %v286
        %v359 = vunpack.c.l.b16 %v287
        %v360 = vunpack.c.l.b16 %v288
        %v361 = vunpack.c.l.b16 %v289
        %v362 = vunpack.c.l.b16 %v290
        %v363 = vunpack.c.l.b16 %v291
        %v364 = vunpack.c.l.b16 %v292
        %v365 = vunpack.c.l.b16 %v293
        %v366 = vunpack.c.l.b16 %v294
        %v367 = vunpack.c.l.b16 %v295
        %v368 = vunpack.c.l.b16 %v296
        %v369 = vunpack.c.l.b16 %v297
        %v370 = vunpack.c.l.b16 %v298
        %v371 = vunpack.c.l.b16 %v299
        %v372 = vunpack.c.l.b16 %v300
        %v373 = vunpack.c.l.b16 %v301
        %v374 = vunpack.c.l.b16 %v302
        %v375 = vunpack.c.l.b16 %v303
        %v376 = vunpack.c.l.b16 %v304
        %v377 = vunpack.c.l.b16 %v305
        %v378 = vunpack.c.l.b16 %v306
        %v379 = vunpack.c.l.b16 %v307
        %v380 = vunpack.c.l.b16 %v308
        %v381 = vunpack.c.l.b16 %v309
        %v382 = vunpack.c.l.b16 %v310
        %v383 = vunpack.c.l.b16 %v311
        %v384 = vunpack.c.l.b16 %v312
        %v385 = vpack.c.b16 %v354, %v353
        %v386 = vpack.c.b16 %v356, %v355
        %v387 = vpack.c.b16 %v358, %v357
        %v388 = vpack.c.b16 %v360, %v359
        %v389 = vpack.c.b16 %v362, %v361
        %v390 = vpack.c.b16 %v364, %v363
        %v391 = vpack.c.b16 %v366, %v365
        %v392 = vpack.c.b16 %v368, %v367
        %v393 = vpack.c.b16 %v370, %v369
        %v394 = vpack.c.b16 %v372, %v371
        %v395 = vpack.c.b16 %v374, %v373
        %v396 = vpack.c.b16 %v376, %v375
        %v397 = vpack.c.b16 %v378, %v377
        %v398 = vpack.c.b16 %v380, %v379
        %v399 = vpack.c.b16 %v382, %v381
        %v400 = vpack.c.b16 %v384, %v383
        %vm401 = vcmask 64512
        %v403 = vsel %vm401, %v385, 0
        %v406 = vsel %vm401, %v386, 0
        %v409 = vsel %vm401, %v387, 0
        %v412 = vsel %vm401, %v388, 0
        %v415 = vsel %vm401, %v389, 0
        %v418 = vsel %vm401, %v390, 0
        %v421 = vsel %vm401, %v391, 0
        %v424 = vsel %vm401, %v392, 0
        %v427 = vsel %vm401, %v393, 0
        %v430 = vsel %vm401, %v394, 0
        %v433 = vsel %vm401, %v395, 0
        %v436 = vsel %vm401, %v396, 0
        %v439 = vsel %vm401, %v397, 0
        %v442 = vsel %vm401, %v398, 0
        %v445 = vsel %vm401, %v399, 0
        %v448 = vsel %vm401, %v400, 0
        %vm450 = vcmask 1043456
        %v452 = vsel %vm450, %v313, 0
        %454 = vmatprep.subr.bf16.mxu0 0
        %455 = vmatpush1.bf16.msra.mxu0 %v452
        %456 = vmatprep.subr.bf16.mxu0 0
        %457 = vmatpush1.bf16.msra.mxu0 0
        %458 = vmatprep.subr.bf16.mxu0 0
        %459 = vmatpush1.bf16.msra.mxu0 0
        %460 = vmatprep.subr.bf16.mxu0 0
        %461 = vmatpush1.bf16.msra.mxu0 0
        %462 = vmatprep.subr.bf16.mxu0 0
        %463 = vmatpush1.bf16.msra.mxu0 0
        %464 = vmatprep.subr.bf16.mxu0 0
        %465 = vmatpush1.bf16.msra.mxu0 0
        %466 = vmatprep.subr.bf16.mxu0 0
        %467 = vmatpush1.bf16.msra.mxu0 0
        %468 = vmatprep.subr.bf16.mxu0 0
        %469 = vmatpush1.bf16.msra.mxu0 0
        %470 = vmatprep.subr.bf16.mxu0 0
        %471 = vmatpush1.bf16.msra.mxu0 0
        %472 = vmatprep.subr.bf16.mxu0 0
        %473 = vmatpush1.bf16.msra.mxu0 0
        %474 = vmatprep.subr.bf16.mxu0 0
        %475 = vmatpush1.bf16.msra.mxu0 0
        %476 = vmatprep.subr.bf16.mxu0 0
        %477 = vmatpush1.bf16.msra.mxu0 0
        %478 = vmatprep.subr.bf16.mxu0 0
        %479 = vmatpush1.bf16.msra.mxu0 0
        %480 = vmatprep.subr.bf16.mxu0 0
        %481 = vmatpush1.bf16.msra.mxu0 0
        %482 = vmatprep.subr.bf16.mxu0 0
        %483 = vmatpush1.bf16.msra.mxu0 0
        %484 = vmatprep.subr.bf16.mxu0 0
        %485 = vmatpush1.bf16.msra.mxu0 0
        %486 = vmatprep.mubr.bf16.mxu0 0
        %487 = vmatmul.mubr.bf16.gmra.mrb[0].mxu0 %v403
        %v488 = vpop.f32.mrb[0].mxu0
        %v489 = vadd.f32 %v319, %v488
        %v490 = vpop.f32.mrb[0].mxu0
        %v491 = vpop.f32.mrb[0].mxu0
        %v492 = vadd.f32 %v319, %v491
        %v493 = vpop.f32.mrb[0].mxu0
        %494 = vmatprep.mubr.bf16.mxu0 0
        %495 = vmatmul.mubr.bf16.gmra.mrb[0].mxu0 %v406
        %v496 = vpop.f32.mrb[0].mxu0
        %v497 = vadd.f32 %v319, %v496
        %v498 = vpop.f32.mrb[0].mxu0
        %v499 = vpop.f32.mrb[0].mxu0
        %v500 = vadd.f32 %v319, %v499
        %v501 = vpop.f32.mrb[0].mxu0
        %502 = vmatprep.mubr.bf16.mxu0 0
        %503 = vmatmul.mubr.bf16.gmra.mrb[0].mxu0 %v409
        %v504 = vpop.f32.mrb[0].mxu0
        %v505 = vadd.f32 %v319, %v504
        %v506 = vpop.f32.mrb[0].mxu0
        %v507 = vpop.f32.mrb[0].mxu0
        %v508 = vadd.f32 %v319, %v507
        %v509 = vpop.f32.mrb[0].mxu0
        %510 = vmatprep.mubr.bf16.mxu0 0
        %511 = vmatmul.mubr.bf16.gmra.mrb[0].mxu0 %v412
        %v512 = vpop.f32.mrb[0].mxu0
        %v513 = vadd.f32 %v319, %v512
        %v514 = vpop.f32.mrb[0].mxu0
        %v515 = vpop.f32.mrb[0].mxu0
        %v516 = vadd.f32 %v319, %v515
        %v517 = vpop.f32.mrb[0].mxu0
        %518 = vmatprep.mubr.bf16.mxu0 0
        %519 = vmatmul.mubr.bf16.gmra.mrb[0].mxu0 %v415
        %v520 = vpop.f32.mrb[0].mxu0
        %v521 = vadd.f32 %v319, %v520
        %v522 = vpop.f32.mrb[0].mxu0
        %v523 = vpop.f32.mrb[0].mxu0
        %v524 = vadd.f32 %v319, %v523
        %v525 = vpop.f32.mrb[0].mxu0
        %526 = vmatprep.mubr.bf16.mxu0 0
        %527 = vmatmul.mubr.bf16.gmra.mrb[0].mxu0 %v418
        %v528 = vpop.f32.mrb[0].mxu0
        %v529 = vadd.f32 %v319, %v528
        %v530 = vpop.f32.mrb[0].mxu0
        %v531 = vpop.f32.mrb[0].mxu0
        %v532 = vadd.f32 %v319, %v531
        %v533 = vpop.f32.mrb[0].mxu0
        %534 = vmatprep.mubr.bf16.mxu0 0
        %535 = vmatmul.mubr.bf16.gmra.mrb[0].mxu0 %v421
        %v536 = vpop.f32.mrb[0].mxu0
        %v537 = vadd.f32 %v319, %v536
        %v538 = vpop.f32.mrb[0].mxu0
        %v539 = vpop.f32.mrb[0].mxu0
        %v540 = vadd.f32 %v319, %v539
        %v541 = vpop.f32.mrb[0].mxu0
        %542 = vmatprep.mubr.bf16.mxu0 0
        %543 = vmatmul.mubr.bf16.gmra.mrb[0].mxu0 %v424
        %v544 = vpop.f32.mrb[0].mxu0
        %v545 = vadd.f32 %v319, %v544
        %v546 = vpop.f32.mrb[0].mxu0
        %v547 = vpop.f32.mrb[0].mxu0
        %v548 = vadd.f32 %v319, %v547
        %v549 = vpop.f32.mrb[0].mxu0
        %550 = vmatprep.mubr.bf16.mxu0 0
        %551 = vmatmul.mubr.bf16.gmra.mrb[0].mxu0 %v427
        %v552 = vpop.f32.mrb[0].mxu0
        %v553 = vadd.f32 %v319, %v552
        %v554 = vpop.f32.mrb[0].mxu0
        %v555 = vpop.f32.mrb[0].mxu0
        %v556 = vadd.f32 %v319, %v555
        %v557 = vpop.f32.mrb[0].mxu0
        %558 = vmatprep.mubr.bf16.mxu0 0
        %559 = vmatmul.mubr.bf16.gmra.mrb[0].mxu0 %v430
        %v560 = vpop.f32.mrb[0].mxu0
        %v561 = vadd.f32 %v319, %v560
        %v562 = vpop.f32.mrb[0].mxu0
        %v563 = vpop.f32.mrb[0].mxu0
        %v564 = vadd.f32 %v319, %v563
        %v565 = vpop.f32.mrb[0].mxu0
        %566 = vmatprep.mubr.bf16.mxu0 0
        %567 = vmatmul.mubr.bf16.gmra.mrb[0].mxu0 %v433
        %v568 = vpop.f32.mrb[0].mxu0
        %v569 = vadd.f32 %v319, %v568
        %v570 = vpop.f32.mrb[0].mxu0
        %v571 = vpop.f32.mrb[0].mxu0
        %v572 = vadd.f32 %v319, %v571
        %v573 = vpop.f32.mrb[0].mxu0
        %574 = vmatprep.mubr.bf16.mxu0 0
        %575 = vmatmul.mubr.bf16.gmra.mrb[0].mxu0 %v436
        %v576 = vpop.f32.mrb[0].mxu0
        %v577 = vadd.f32 %v319, %v576
        %v578 = vpop.f32.mrb[0].mxu0
        %v579 = vpop.f32.mrb[0].mxu0
        %v580 = vadd.f32 %v319, %v579
        %v581 = vpop.f32.mrb[0].mxu0
        %582 = vmatprep.mubr.bf16.mxu0 0
        %583 = vmatmul.mubr.bf16.gmra.mrb[0].mxu0 %v439
        %v584 = vpop.f32.mrb[0].mxu0
        %v585 = vadd.f32 %v319, %v584
        %v586 = vpop.f32.mrb[0].mxu0
        %v587 = vpop.f32.mrb[0].mxu0
        %v588 = vadd.f32 %v319, %v587
        %v589 = vpop.f32.mrb[0].mxu0
        %590 = vmatprep.mubr.bf16.mxu0 0
        %591 = vmatmul.mubr.bf16.gmra.mrb[0].mxu0 %v442
        %v592 = vpop.f32.mrb[0].mxu0
        %v593 = vadd.f32 %v319, %v592
        %v594 = vpop.f32.mrb[0].mxu0
        %v595 = vpop.f32.mrb[0].mxu0
        %v596 = vadd.f32 %v319, %v595
        %v597 = vpop.f32.mrb[0].mxu0
        %598 = vmatprep.mubr.bf16.mxu0 0
        %599 = vmatmul.mubr.bf16.gmra.mrb[0].mxu0 %v445
        %v600 = vpop.f32.mrb[0].mxu0
        %v601 = vadd.f32 %v319, %v600
        %v602 = vpop.f32.mrb[0].mxu0
        %v603 = vpop.f32.mrb[0].mxu0
        %v604 = vadd.f32 %v319, %v603
        %v605 = vpop.f32.mrb[0].mxu0
        %606 = vmatprep.mubr.bf16.mxu0 0
        %607 = vmatmul.mubr.bf16.gmra.mrb[0].mxu0 %v448
        %v608 = vpop.f32.mrb[0].mxu0
        %v609 = vadd.f32 %v319, %v608
        %v610 = vpop.f32.mrb[0].mxu0
        %v611 = vpop.f32.mrb[0].mxu0
        %v612 = vadd.f32 %v319, %v611
        %v613 = vpop.f32.mrb[0].mxu0
        %614 = vdwg.mxu0
        %v615 = vmax.f32 %v489, 0.0
        %v616 = vmax.f32 %v492, 0.0
        %v617 = vmax.f32 %v497, 0.0
        %v618 = vmax.f32 %v500, 0.0
        %v619 = vmax.f32 %v505, 0.0
        %v620 = vmax.f32 %v508, 0.0
        %v621 = vmax.f32 %v513, 0.0
        %v622 = vmax.f32 %v516, 0.0
        %v623 = vmax.f32 %v521, 0.0
        %v624 = vmax.f32 %v524, 0.0
        %v625 = vmax.f32 %v529, 0.0
        %v626 = vmax.f32 %v532, 0.0
        %v627 = vmax.f32 %v537, 0.0
        %v628 = vmax.f32 %v540, 0.0
        %v629 = vmax.f32 %v545, 0.0
        %v630 = vmax.f32 %v548, 0.0
        %v631 = vmax.f32 %v553, 0.0
        %v632 = vmax.f32 %v556, 0.0
        %v633 = vmax.f32 %v561, 0.0
        %v634 = vmax.f32 %v564, 0.0
        %v635 = vmax.f32 %v569, 0.0
        %v636 = vmax.f32 %v572, 0.0
        %v637 = vmax.f32 %v577, 0.0
        %v638 = vmax.f32 %v580, 0.0
        %v639 = vmax.f32 %v585, 0.0
        %v640 = vmax.f32 %v588, 0.0
        %v641 = vmax.f32 %v593, 0.0
        %v642 = vmax.f32 %v596, 0.0
        %v643 = vmax.f32 %v601, 0.0
        %v644 = vmax.f32 %v604, 0.0
        %v645 = vmax.f32 %v609, 0.0
        %v646 = vmax.f32 %v612, 0.0
        %v647 = vpack.c.bf16 %v616, %v615
        %v648 = vpack.c.bf16 %v618, %v617
        %v649 = vpack.c.bf16 %v620, %v619
        %v650 = vpack.c.bf16 %v622, %v621
        %v651 = vpack.c.bf16 %v624, %v623
        %v652 = vpack.c.bf16 %v626, %v625
        %v653 = vpack.c.bf16 %v628, %v627
        %v654 = vpack.c.bf16 %v630, %v629
        %v655 = vpack.c.bf16 %v632, %v631
        %v656 = vpack.c.bf16 %v634, %v633
        %v657 = vpack.c.bf16 %v636, %v635
        %v658 = vpack.c.bf16 %v638, %v637
        %v659 = vpack.c.bf16 %v640, %v639
        %v660 = vpack.c.bf16 %v642, %v641
        %v661 = vpack.c.bf16 %v644, %v643
        %v662 = vpack.c.bf16 %v646, %v645
        %v663 = vld [vmem:[%s3] sm:$0xf]
        %v664 = vld [vmem:[%s3 + $0x4] sm:$0xf]
        %v665 = vld [vmem:[%s3 + $0x8] sm:$0xf]
        %v666 = vld [vmem:[%s3 + $0xc] sm:$0xf]
        %v667 = vld [vmem:[%s3 + $0x10] sm:$0xf]
        %v668 = vld [vmem:[%s3 + $0x14] sm:$0xf]
        %v669 = vld [vmem:[%s3 + $0x18] sm:$0xf]
        %v670 = vld [vmem:[%s3 + $0x1c] sm:$0xf]
        %v671 = vld [vmem:[%s3 + $0x20] sm:$0xf]
        %v672 = vld [vmem:[%s3 + $0x24] sm:$0xf]
        %v673 = vld [vmem:[%s3 + $0x28] sm:$0xf]
        %v674 = vld [vmem:[%s3 + $0x2c] sm:$0xf]
        %v675 = vld [vmem:[%s3 + $0x30] sm:$0xf]
        %v676 = vld [vmem:[%s3 + $0x34] sm:$0xf]
        %v677 = vld [vmem:[%s3 + $0x38] sm:$0xf]
        %v678 = vld [vmem:[%s3 + $0x3c] sm:$0xf]
        %v679 = vld [vmem:[%s4] sm:$0x1]
        %v681 = vlaneseq
        %v682 = vshrl.u32 %v681, 7
        %v683 = vsub.s32 0, %v682
        %v684 = vrot.slane %v679, %v683
        %v702 = vunpack.c.l.b16 %v663
        %v703 = vunpack.c.l.b16 %v664
        %v704 = vunpack.c.l.b16 %v665
        %v705 = vunpack.c.l.b16 %v666
        %v706 = vunpack.c.l.b16 %v667
        %v707 = vunpack.c.l.b16 %v668
        %v708 = vunpack.c.l.b16 %v669
        %v709 = vunpack.c.l.b16 %v670
        %v710 = vunpack.c.l.b16 %v671
        %v711 = vunpack.c.l.b16 %v672
        %v712 = vunpack.c.l.b16 %v673
        %v713 = vunpack.c.l.b16 %v674
        %v714 = vunpack.c.l.b16 %v675
        %v715 = vunpack.c.l.b16 %v676
        %v716 = vunpack.c.l.b16 %v677
        %v717 = vunpack.c.l.b16 %v678
        %v718 = vpack.c.b16 %v703, %v702
        %v719 = vpack.c.b16 %v705, %v704
        %v720 = vpack.c.b16 %v707, %v706
        %v721 = vpack.c.b16 %v709, %v708
        %v722 = vpack.c.b16 %v711, %v710
        %v723 = vpack.c.b16 %v713, %v712
        %v724 = vpack.c.b16 %v715, %v714
        %v725 = vpack.c.b16 %v717, %v716
        %734 = vmatprep.subr.bf16.mxu0 0
        %735 = vmatpush1.bf16.msra.mxu0 %v718
        %736 = vmatprep.subr.bf16.mxu0 0
        %737 = vmatpush1.bf16.msra.mxu0 %v719
        %738 = vmatprep.subr.bf16.mxu0 0
        %739 = vmatpush1.bf16.msra.mxu0 %v720
        %740 = vmatprep.subr.bf16.mxu0 0
        %741 = vmatpush1.bf16.msra.mxu0 %v721
        %742 = vmatprep.subr.bf16.mxu0 0
        %743 = vmatpush1.bf16.msra.mxu0 %v722
        %744 = vmatprep.subr.bf16.mxu0 0
        %745 = vmatpush1.bf16.msra.mxu0 %v723
        %746 = vmatprep.subr.bf16.mxu0 0
        %747 = vmatpush1.bf16.msra.mxu0 %v724
        %748 = vmatprep.subr.bf16.mxu0 0
        %749 = vmatpush1.bf16.msra.mxu0 %v725
        %750 = vmatprep.subr.bf16.mxu0 0
        %751 = vmatpush1.bf16.msra.mxu0 0
        %752 = vmatprep.subr.bf16.mxu0 0
        %753 = vmatpush1.bf16.msra.mxu0 0
        %754 = vmatprep.subr.bf16.mxu0 0
        %755 = vmatpush1.bf16.msra.mxu0 0
        %756 = vmatprep.subr.bf16.mxu0 0
        %757 = vmatpush1.bf16.msra.mxu0 0
        %758 = vmatprep.subr.bf16.mxu0 0
        %759 = vmatpush1.bf16.msra.mxu0 0
        %760 = vmatprep.subr.bf16.mxu0 0
        %761 = vmatpush1.bf16.msra.mxu0 0
        %762 = vmatprep.subr.bf16.mxu0 0
        %763 = vmatpush1.bf16.msra.mxu0 0
        %764 = vmatprep.subr.bf16.mxu0 0
        %765 = vmatpush1.bf16.msra.mxu0 0
        %766 = vmatprep.mubr.bf16.mxu0 0
        %767 = vmatmul.mubr.bf16.gmra.mrb[0].mxu0 %v647
        %v768 = vpop.f32.mrb[0].mxu0
        %v769 = vadd.f32 %v684, %v768
        %v770 = vpop.f32.mrb[0].mxu0
        %v771 = vpop.f32.mrb[0].mxu0
        %v772 = vadd.f32 %v684, %v771
        %v773 = vpop.f32.mrb[0].mxu0
        %774 = vmatprep.mubr.bf16.mxu0 0
        %775 = vmatmul.mubr.bf16.gmra.mrb[0].mxu0 %v648
        %v776 = vpop.f32.mrb[0].mxu0
        %v777 = vadd.f32 %v684, %v776
        %v778 = vpop.f32.mrb[0].mxu0
        %v779 = vpop.f32.mrb[0].mxu0
        %v780 = vadd.f32 %v684, %v779
        %v781 = vpop.f32.mrb[0].mxu0
        %782 = vmatprep.mubr.bf16.mxu0 0
        %783 = vmatmul.mubr.bf16.gmra.mrb[0].mxu0 %v649
        %v784 = vpop.f32.mrb[0].mxu0
        %v785 = vadd.f32 %v684, %v784
        %v786 = vpop.f32.mrb[0].mxu0
        %v787 = vpop.f32.mrb[0].mxu0
        %v788 = vadd.f32 %v684, %v787
        %v789 = vpop.f32.mrb[0].mxu0
        %790 = vmatprep.mubr.bf16.mxu0 0
        %791 = vmatmul.mubr.bf16.gmra.mrb[0].mxu0 %v650
        %v792 = vpop.f32.mrb[0].mxu0
        %v793 = vadd.f32 %v684, %v792
        %v794 = vpop.f32.mrb[0].mxu0
        %v795 = vpop.f32.mrb[0].mxu0
        %v796 = vadd.f32 %v684, %v795
        %v797 = vpop.f32.mrb[0].mxu0
        %798 = vmatprep.mubr.bf16.mxu0 0
        %799 = vmatmul.mubr.bf16.gmra.mrb[0].mxu0 %v651
        %v800 = vpop.f32.mrb[0].mxu0
        %v801 = vadd.f32 %v684, %v800
        %v802 = vpop.f32.mrb[0].mxu0
        %v803 = vpop.f32.mrb[0].mxu0
        %v804 = vadd.f32 %v684, %v803
        %v805 = vpop.f32.mrb[0].mxu0
        %806 = vmatprep.mubr.bf16.mxu0 0
        %807 = vmatmul.mubr.bf16.gmra.mrb[0].mxu0 %v652
        %v808 = vpop.f32.mrb[0].mxu0
        %v809 = vadd.f32 %v684, %v808
        %v810 = vpop.f32.mrb[0].mxu0
        %v811 = vpop.f32.mrb[0].mxu0
        %v812 = vadd.f32 %v684, %v811
        %v813 = vpop.f32.mrb[0].mxu0
        %814 = vmatprep.mubr.bf16.mxu0 0
        %815 = vmatmul.mubr.bf16.gmra.mrb[0].mxu0 %v653
        %v816 = vpop.f32.mrb[0].mxu0
        %v817 = vadd.f32 %v684, %v816
        %v818 = vpop.f32.mrb[0].mxu0
        %v819 = vpop.f32.mrb[0].mxu0
        %v820 = vadd.f32 %v684, %v819
        %v821 = vpop.f32.mrb[0].mxu0
        %822 = vmatprep.mubr.bf16.mxu0 0
        %823 = vmatmul.mubr.bf16.gmra.mrb[0].mxu0 %v654
        %v824 = vpop.f32.mrb[0].mxu0
        %v825 = vadd.f32 %v684, %v824
        %v826 = vpop.f32.mrb[0].mxu0
        %v827 = vpop.f32.mrb[0].mxu0
        %v828 = vadd.f32 %v684, %v827
        %v829 = vpop.f32.mrb[0].mxu0
        %830 = vmatprep.mubr.bf16.mxu0 0
        %831 = vmatmul.mubr.bf16.gmra.mrb[0].mxu0 %v655
        %v832 = vpop.f32.mrb[0].mxu0
        %v833 = vadd.f32 %v684, %v832
        %v834 = vpop.f32.mrb[0].mxu0
        %v835 = vpop.f32.mrb[0].mxu0
        %v836 = vadd.f32 %v684, %v835
        %v837 = vpop.f32.mrb[0].mxu0
        %838 = vmatprep.mubr.bf16.mxu0 0
        %839 = vmatmul.mubr.bf16.gmra.mrb[0].mxu0 %v656
        %v840 = vpop.f32.mrb[0].mxu0
        %v841 = vadd.f32 %v684, %v840
        %v842 = vpop.f32.mrb[0].mxu0
        %v843 = vpop.f32.mrb[0].mxu0
        %v844 = vadd.f32 %v684, %v843
        %v845 = vpop.f32.mrb[0].mxu0
        %846 = vmatprep.mubr.bf16.mxu0 0
        %847 = vmatmul.mubr.bf16.gmra.mrb[0].mxu0 %v657
        %v848 = vpop.f32.mrb[0].mxu0
        %v849 = vadd.f32 %v684, %v848
        %v850 = vpop.f32.mrb[0].mxu0
        %v851 = vpop.f32.mrb[0].mxu0
        %v852 = vadd.f32 %v684, %v851
        %v853 = vpop.f32.mrb[0].mxu0
        %854 = vmatprep.mubr.bf16.mxu0 0
        %855 = vmatmul.mubr.bf16.gmra.mrb[0].mxu0 %v658
        %v856 = vpop.f32.mrb[0].mxu0
        %v857 = vadd.f32 %v684, %v856
        %v858 = vpop.f32.mrb[0].mxu0
        %v859 = vpop.f32.mrb[0].mxu0
        %v860 = vadd.f32 %v684, %v859
        %v861 = vpop.f32.mrb[0].mxu0
        %862 = vmatprep.mubr.bf16.mxu0 0
        %863 = vmatmul.mubr.bf16.gmra.mrb[0].mxu0 %v659
        %v864 = vpop.f32.mrb[0].mxu0
        %v865 = vadd.f32 %v684, %v864
        %v866 = vpop.f32.mrb[0].mxu0
        %v867 = vpop.f32.mrb[0].mxu0
        %v868 = vadd.f32 %v684, %v867
        %v869 = vpop.f32.mrb[0].mxu0
        %870 = vmatprep.mubr.bf16.mxu0 0
        %871 = vmatmul.mubr.bf16.gmra.mrb[0].mxu0 %v660
        %v872 = vpop.f32.mrb[0].mxu0
        %v873 = vadd.f32 %v684, %v872
        %v874 = vpop.f32.mrb[0].mxu0
        %v875 = vpop.f32.mrb[0].mxu0
        %v876 = vadd.f32 %v684, %v875
        %v877 = vpop.f32.mrb[0].mxu0
        %878 = vmatprep.mubr.bf16.mxu0 0
        %879 = vmatmul.mubr.bf16.gmra.mrb[0].mxu0 %v661
        %v880 = vpop.f32.mrb[0].mxu0
        %v881 = vadd.f32 %v684, %v880
        %v882 = vpop.f32.mrb[0].mxu0
        %v883 = vpop.f32.mrb[0].mxu0
        %v884 = vadd.f32 %v684, %v883
        %v885 = vpop.f32.mrb[0].mxu0
        %886 = vmatprep.mubr.bf16.mxu0 0
        %887 = vmatmul.mubr.bf16.gmra.mrb[0].mxu0 %v662
        %v888 = vpop.f32.mrb[0].mxu0
        %v889 = vadd.f32 %v684, %v888
        %v890 = vpop.f32.mrb[0].mxu0
        %v891 = vpop.f32.mrb[0].mxu0
        %v892 = vadd.f32 %v684, %v891
        %v893 = vpop.f32.mrb[0].mxu0
        %894 = vdwg.mxu0
        %v895 = vmax.f32 %v769, 0.0
        %v896 = vmax.f32 %v772, 0.0
        %v897 = vmax.f32 %v777, 0.0
        %v898 = vmax.f32 %v780, 0.0
        %v899 = vmax.f32 %v785, 0.0
        %v900 = vmax.f32 %v788, 0.0
        %v901 = vmax.f32 %v793, 0.0
        %v902 = vmax.f32 %v796, 0.0
        %v903 = vmax.f32 %v801, 0.0
        %v904 = vmax.f32 %v804, 0.0
        %v905 = vmax.f32 %v809, 0.0
        %v906 = vmax.f32 %v812, 0.0
        %v907 = vmax.f32 %v817, 0.0
        %v908 = vmax.f32 %v820, 0.0
        %v909 = vmax.f32 %v825, 0.0
        %v910 = vmax.f32 %v828, 0.0
        %v911 = vmax.f32 %v833, 0.0
        %v912 = vmax.f32 %v836, 0.0
        %v913 = vmax.f32 %v841, 0.0
        %v914 = vmax.f32 %v844, 0.0
        %v915 = vmax.f32 %v849, 0.0
        %v916 = vmax.f32 %v852, 0.0
        %v917 = vmax.f32 %v857, 0.0
        %v918 = vmax.f32 %v860, 0.0
        %v919 = vmax.f32 %v865, 0.0
        %v920 = vmax.f32 %v868, 0.0
        %v921 = vmax.f32 %v873, 0.0
        %v922 = vmax.f32 %v876, 0.0
        %v923 = vmax.f32 %v881, 0.0
        %v924 = vmax.f32 %v884, 0.0
        %v925 = vmax.f32 %v889, 0.0
        %v926 = vmax.f32 %v892, 0.0
        %v927 = vpack.c.bf16 %v896, %v895
        %v928 = vpack.c.bf16 %v898, %v897
        %v929 = vpack.c.bf16 %v900, %v899
        %v930 = vpack.c.bf16 %v902, %v901
        %v931 = vpack.c.bf16 %v904, %v903
        %v932 = vpack.c.bf16 %v906, %v905
        %v933 = vpack.c.bf16 %v908, %v907
        %v934 = vpack.c.bf16 %v910, %v909
        %v935 = vpack.c.bf16 %v912, %v911
        %v936 = vpack.c.bf16 %v914, %v913
        %v937 = vpack.c.bf16 %v916, %v915
        %v938 = vpack.c.bf16 %v918, %v917
        %v939 = vpack.c.bf16 %v920, %v919
        %v940 = vpack.c.bf16 %v922, %v921
        %v941 = vpack.c.bf16 %v924, %v923
        %v942 = vpack.c.bf16 %v926, %v925
        %v943 = vld [vmem:[%s5] sm:$0xf]
        %v944 = vld [vmem:[%s5 + $0x4] sm:$0xf]
        %v945 = vld [vmem:[%s5 + $0x8] sm:$0xf]
        %v946 = vld [vmem:[%s5 + $0xc] sm:$0xf]
        %v947 = vld [vmem:[%s5 + $0x10] sm:$0xf]
        %v948 = vld [vmem:[%s5 + $0x14] sm:$0xf]
        %v949 = vld [vmem:[%s5 + $0x18] sm:$0xf]
        %v950 = vld [vmem:[%s5 + $0x1c] sm:$0xf]
        %v951 = vld [vmem:[%s5 + $0x20] sm:$0xf]
        %v952 = vld [vmem:[%s5 + $0x24] sm:$0xf]
        %v953 = vld [vmem:[%s5 + $0x28] sm:$0xf]
        %v954 = vld [vmem:[%s5 + $0x2c] sm:$0xf]
        %v955 = vld [vmem:[%s5 + $0x30] sm:$0xf]
        %v956 = vld [vmem:[%s5 + $0x34] sm:$0xf]
        %v957 = vld [vmem:[%s5 + $0x38] sm:$0xf]
        %v958 = vld [vmem:[%s5 + $0x3c] sm:$0xf]
        %v959 = vld [vmem:[%s6] sm:$0x1]
        %v961 = vlaneseq
        %v962 = vshrl.u32 %v961, 7
        %v963 = vsub.s32 0, %v962
        %v964 = vrot.slane %v959, %v963
        %v982 = vunpack.c.l.b16 %v943
        %v983 = vunpack.c.l.b16 %v944
        %v984 = vunpack.c.l.b16 %v945
        %v985 = vunpack.c.l.b16 %v946
        %v986 = vunpack.c.l.b16 %v947
        %v987 = vunpack.c.l.b16 %v948
        %v988 = vunpack.c.l.b16 %v949
        %v989 = vunpack.c.l.b16 %v950
        %v990 = vunpack.c.l.b16 %v951
        %v991 = vunpack.c.l.b16 %v952
        %v992 = vunpack.c.l.b16 %v953
        %v993 = vunpack.c.l.b16 %v954
        %v994 = vunpack.c.l.b16 %v955
        %v995 = vunpack.c.l.b16 %v956
        %v996 = vunpack.c.l.b16 %v957
        %v997 = vunpack.c.l.b16 %v958
        %v998 = vpack.c.b16 %v983, %v982
        %v999 = vpack.c.b16 %v985, %v984
        %v1000 = vpack.c.b16 %v987, %v986
        %v1001 = vpack.c.b16 %v989, %v988
        %v1002 = vpack.c.b16 %v991, %v990
        %v1003 = vpack.c.b16 %v993, %v992
        %v1004 = vpack.c.b16 %v995, %v994
        %v1005 = vpack.c.b16 %v997, %v996
        %1014 = vmatprep.subr.bf16.mxu0 0
        %1015 = vmatpush1.bf16.msra.mxu0 %v998
        %1016 = vmatprep.subr.bf16.mxu0 0
        %1017 = vmatpush1.bf16.msra.mxu0 %v999
        %1018 = vmatprep.subr.bf16.mxu0 0
        %1019 = vmatpush1.bf16.msra.mxu0 %v1000
        %1020 = vmatprep.subr.bf16.mxu0 0
        %1021 = vmatpush1.bf16.msra.mxu0 %v1001
        %1022 = vmatprep.subr.bf16.mxu0 0
        %1023 = vmatpush1.bf16.msra.mxu0 %v1002
        %1024 = vmatprep.subr.bf16.mxu0 0
        %1025 = vmatpush1.bf16.msra.mxu0 %v1003
        %1026 = vmatprep.subr.bf16.mxu0 0
        %1027 = vmatpush1.bf16.msra.mxu0 %v1004
        %1028 = vmatprep.subr.bf16.mxu0 0
        %1029 = vmatpush1.bf16.msra.mxu0 %v1005
        %1030 = vmatprep.subr.bf16.mxu0 0
        %1031 = vmatpush1.bf16.msra.mxu0 0
        %1032 = vmatprep.subr.bf16.mxu0 0
        %1033 = vmatpush1.bf16.msra.mxu0 0
        %1034 = vmatprep.subr.bf16.mxu0 0
        %1035 = vmatpush1.bf16.msra.mxu0 0
        %1036 = vmatprep.subr.bf16.mxu0 0
        %1037 = vmatpush1.bf16.msra.mxu0 0
        %1038 = vmatprep.subr.bf16.mxu0 0
        %1039 = vmatpush1.bf16.msra.mxu0 0
        %1040 = vmatprep.subr.bf16.mxu0 0
        %1041 = vmatpush1.bf16.msra.mxu0 0
        %1042 = vmatprep.subr.bf16.mxu0 0
        %1043 = vmatpush1.bf16.msra.mxu0 0
        %1044 = vmatprep.subr.bf16.mxu0 0
        %1045 = vmatpush1.bf16.msra.mxu0 0
        %1046 = vmatprep.mubr.bf16.mxu0 0
        %1047 = vmatmul.mubr.bf16.gmra.mrb[0].mxu0 %v927
        %v1048 = vpop.f32.mrb[0].mxu0
        %v1049 = vadd.f32 %v964, %v1048
        %v1050 = vpop.f32.mrb[0].mxu0
        %v1051 = vpop.f32.mrb[0].mxu0
        %v1052 = vadd.f32 %v964, %v1051
        %v1053 = vpop.f32.mrb[0].mxu0
        %1054 = vmatprep.mubr.bf16.mxu0 0
        %1055 = vmatmul.mubr.bf16.gmra.mrb[0].mxu0 %v928
        %v1056 = vpop.f32.mrb[0].mxu0
        %v1057 = vadd.f32 %v964, %v1056
        %v1058 = vpop.f32.mrb[0].mxu0
        %v1059 = vpop.f32.mrb[0].mxu0
        %v1060 = vadd.f32 %v964, %v1059
        %v1061 = vpop.f32.mrb[0].mxu0
        %1062 = vmatprep.mubr.bf16.mxu0 0
        %1063 = vmatmul.mubr.bf16.gmra.mrb[0].mxu0 %v929
        %v1064 = vpop.f32.mrb[0].mxu0
        %v1065 = vadd.f32 %v964, %v1064
        %v1066 = vpop.f32.mrb[0].mxu0
        %v1067 = vpop.f32.mrb[0].mxu0
        %v1068 = vadd.f32 %v964, %v1067
        %v1069 = vpop.f32.mrb[0].mxu0
        %1070 = vmatprep.mubr.bf16.mxu0 0
        %1071 = vmatmul.mubr.bf16.gmra.mrb[0].mxu0 %v930
        %v1072 = vpop.f32.mrb[0].mxu0
        %v1073 = vadd.f32 %v964, %v1072
        %v1074 = vpop.f32.mrb[0].mxu0
        %v1075 = vpop.f32.mrb[0].mxu0
        %v1076 = vadd.f32 %v964, %v1075
        %v1077 = vpop.f32.mrb[0].mxu0
        %1078 = vmatprep.mubr.bf16.mxu0 0
        %1079 = vmatmul.mubr.bf16.gmra.mrb[0].mxu0 %v931
        %v1080 = vpop.f32.mrb[0].mxu0
        %v1081 = vadd.f32 %v964, %v1080
        %v1082 = vpop.f32.mrb[0].mxu0
        %v1083 = vpop.f32.mrb[0].mxu0
        %v1084 = vadd.f32 %v964, %v1083
        %v1085 = vpop.f32.mrb[0].mxu0
        %1086 = vmatprep.mubr.bf16.mxu0 0
        %1087 = vmatmul.mubr.bf16.gmra.mrb[0].mxu0 %v932
        %v1088 = vpop.f32.mrb[0].mxu0
        %v1089 = vadd.f32 %v964, %v1088
        %v1090 = vpop.f32.mrb[0].mxu0
        %v1091 = vpop.f32.mrb[0].mxu0
        %v1092 = vadd.f32 %v964, %v1091
        %v1093 = vpop.f32.mrb[0].mxu0
        %1094 = vmatprep.mubr.bf16.mxu0 0
        %1095 = vmatmul.mubr.bf16.gmra.mrb[0].mxu0 %v933
        %v1096 = vpop.f32.mrb[0].mxu0
        %v1097 = vadd.f32 %v964, %v1096
        %v1098 = vpop.f32.mrb[0].mxu0
        %v1099 = vpop.f32.mrb[0].mxu0
        %v1100 = vadd.f32 %v964, %v1099
        %v1101 = vpop.f32.mrb[0].mxu0
        %1102 = vmatprep.mubr.bf16.mxu0 0
        %1103 = vmatmul.mubr.bf16.gmra.mrb[0].mxu0 %v934
        %v1104 = vpop.f32.mrb[0].mxu0
        %v1105 = vadd.f32 %v964, %v1104
        %v1106 = vpop.f32.mrb[0].mxu0
        %v1107 = vpop.f32.mrb[0].mxu0
        %v1108 = vadd.f32 %v964, %v1107
        %v1109 = vpop.f32.mrb[0].mxu0
        %1110 = vmatprep.mubr.bf16.mxu0 0
        %1111 = vmatmul.mubr.bf16.gmra.mrb[0].mxu0 %v935
        %v1112 = vpop.f32.mrb[0].mxu0
        %v1113 = vadd.f32 %v964, %v1112
        %v1114 = vpop.f32.mrb[0].mxu0
        %v1115 = vpop.f32.mrb[0].mxu0
        %v1116 = vadd.f32 %v964, %v1115
        %v1117 = vpop.f32.mrb[0].mxu0
        %1118 = vmatprep.mubr.bf16.mxu0 0
        %1119 = vmatmul.mubr.bf16.gmra.mrb[0].mxu0 %v936
        %v1120 = vpop.f32.mrb[0].mxu0
        %v1121 = vadd.f32 %v964, %v1120
        %v1122 = vpop.f32.mrb[0].mxu0
        %v1123 = vpop.f32.mrb[0].mxu0
        %v1124 = vadd.f32 %v964, %v1123
        %v1125 = vpop.f32.mrb[0].mxu0
        %1126 = vmatprep.mubr.bf16.mxu0 0
        %1127 = vmatmul.mubr.bf16.gmra.mrb[0].mxu0 %v937
        %v1128 = vpop.f32.mrb[0].mxu0
        %v1129 = vadd.f32 %v964, %v1128
        %v1130 = vpop.f32.mrb[0].mxu0
        %v1131 = vpop.f32.mrb[0].mxu0
        %v1132 = vadd.f32 %v964, %v1131
        %v1133 = vpop.f32.mrb[0].mxu0
        %1134 = vmatprep.mubr.bf16.mxu0 0
        %1135 = vmatmul.mubr.bf16.gmra.mrb[0].mxu0 %v938
        %v1136 = vpop.f32.mrb[0].mxu0
        %v1137 = vadd.f32 %v964, %v1136
        %v1138 = vpop.f32.mrb[0].mxu0
        %v1139 = vpop.f32.mrb[0].mxu0
        %v1140 = vadd.f32 %v964, %v1139
        %v1141 = vpop.f32.mrb[0].mxu0
        %1142 = vmatprep.mubr.bf16.mxu0 0
        %1143 = vmatmul.mubr.bf16.gmra.mrb[0].mxu0 %v939
        %v1144 = vpop.f32.mrb[0].mxu0
        %v1145 = vadd.f32 %v964, %v1144
        %v1146 = vpop.f32.mrb[0].mxu0
        %v1147 = vpop.f32.mrb[0].mxu0
        %v1148 = vadd.f32 %v964, %v1147
        %v1149 = vpop.f32.mrb[0].mxu0
        %1150 = vmatprep.mubr.bf16.mxu0 0
        %1151 = vmatmul.mubr.bf16.gmra.mrb[0].mxu0 %v940
        %v1152 = vpop.f32.mrb[0].mxu0
        %v1153 = vadd.f32 %v964, %v1152
        %v1154 = vpop.f32.mrb[0].mxu0
        %v1155 = vpop.f32.mrb[0].mxu0
        %v1156 = vadd.f32 %v964, %v1155
        %v1157 = vpop.f32.mrb[0].mxu0
        %1158 = vmatprep.mubr.bf16.mxu0 0
        %1159 = vmatmul.mubr.bf16.gmra.mrb[0].mxu0 %v941
        %v1160 = vpop.f32.mrb[0].mxu0
        %v1161 = vadd.f32 %v964, %v1160
        %v1162 = vpop.f32.mrb[0].mxu0
        %v1163 = vpop.f32.mrb[0].mxu0
        %v1164 = vadd.f32 %v964, %v1163
        %v1165 = vpop.f32.mrb[0].mxu0
        %1166 = vmatprep.mubr.bf16.mxu0 0
        %1167 = vmatmul.mubr.bf16.gmra.mrb[0].mxu0 %v942
        %v1168 = vpop.f32.mrb[0].mxu0
        %v1169 = vadd.f32 %v964, %v1168
        %v1170 = vpop.f32.mrb[0].mxu0
        %v1171 = vpop.f32.mrb[0].mxu0
        %v1172 = vadd.f32 %v964, %v1171
        %v1173 = vpop.f32.mrb[0].mxu0
        %1174 = vdwg.mxu0
        %1175 = vst [vmem:[%s272] sm:$0xff] %v1049
        %1176 = vst [vmem:[%s272 + $0x8] sm:$0xff] %v1052
        %1177 = vst [vmem:[%s272 + $0x10] sm:$0xff] %v1057
        %1178 = vst [vmem:[%s272 + $0x18] sm:$0xff] %v1060
        %1179 = vst [vmem:[%s272 + $0x20] sm:$0xff] %v1065
        %1180 = vst [vmem:[%s272 + $0x28] sm:$0xff] %v1068
        %1181 = vst [vmem:[%s272 + $0x30] sm:$0xff] %v1073
        %1182 = vst [vmem:[%s272 + $0x38] sm:$0xff] %v1076
        %1183 = vst [vmem:[%s272 + $0x40] sm:$0xff] %v1081
        %1184 = vst [vmem:[%s272 + $0x48] sm:$0xff] %v1084
        %1185 = vst [vmem:[%s272 + $0x50] sm:$0xff] %v1089
        %1186 = vst [vmem:[%s272 + $0x58] sm:$0xff] %v1092
        %1187 = vst [vmem:[%s272 + $0x60] sm:$0xff] %v1097
        %1188 = vst [vmem:[%s272 + $0x68] sm:$0xff] %v1100
        %1189 = vst [vmem:[%s272 + $0x70] sm:$0xff] %v1105
        %1190 = vst [vmem:[%s272 + $0x78] sm:$0xff] %v1108
        %1191 = vst [vmem:[%s272 + $0x80] sm:$0xff] %v1113
        %1192 = vst [vmem:[%s272 + $0x88] sm:$0xff] %v1116
        %1193 = vst [vmem:[%s272 + $0x90] sm:$0xff] %v1121
        %1194 = vst [vmem:[%s272 + $0x98] sm:$0xff] %v1124
        %1195 = vst [vmem:[%s272 + $0xa0] sm:$0xff] %v1129
        %1196 = vst [vmem:[%s272 + $0xa8] sm:$0xff] %v1132
        %1197 = vst [vmem:[%s272 + $0xb0] sm:$0xff] %v1137
        %1198 = vst [vmem:[%s272 + $0xb8] sm:$0xff] %v1140
        %1199 = vst [vmem:[%s272 + $0xc0] sm:$0xff] %v1145
        %1200 = vst [vmem:[%s272 + $0xc8] sm:$0xff] %v1148
        %1201 = vst [vmem:[%s272 + $0xd0] sm:$0xff] %v1153
        %1202 = vst [vmem:[%s272 + $0xd8] sm:$0xff] %v1156
        %1203 = vst [vmem:[%s272 + $0xe0] sm:$0xff] %v1161
        %1204 = vst [vmem:[%s272 + $0xe8] sm:$0xff] %v1164
        %1205 = vst [vmem:[%s272 + $0xf0] sm:$0xff] %v1169
        %1206 = vst [vmem:[%s272 + $0xf8] sm:$0xff] %v1172
        %s1207 = sand.u32 %s181, 1
        %s1208 = scalar_lea.sflag [#allocation3], %s1207
        %s1209 = sand.u32 %s181, 1
        %s1210 = smul.addr %s1209, 256
        %s1211 = scalar_lea.vmem [#allocation2], %s1210
        // Predicated region
        $region49: #{tpu_custom_call.1} parent=47 // pred_check
          %p1212 = pneg %p191
        $region50: #{tpu_custom_call.1} parent=47 // pred_check_branch
          %1214 = sbr.rel (%p1212) target = $region52
        $region51: #{tpu_custom_call.1} parent=47 // pred_region
          %s1215 = smul.u32 32, %s21
          %s1217 = ssub.s32 4096, 4096
          %1218 = vsyncadd %s1208, %s1217
          %s1219 = smul.addr %s1215, 128
          %s1220 = scalar_lea.hbm %s7, %s1219
          %s1221 = sshll.u32 %s1211, 4
          %s1222 = int_to_ptr.vmem [resolvable:$true] %s1221
          %1227 = dma.vmem_to_hbm [thread:$0]  %s1222, 4096, %s1220, %s1208, 128, 128, 8
        $region52: #{tpu_custom_call.1} parent=47 // pred_fallthru
          _
      $region48: #{tpu_custom_call.1} parent=5 // pred_fallthru
        _
      %p1228 = scmp.le.s32.totalorder 2, %s16
      // Predicated region
      $region53: #{tpu_custom_call.1} parent=5 // pred_check
        %p1229 = pneg %p1228
      $region54: #{tpu_custom_call.1} parent=5 // pred_check_branch
        %1231 = sbr.rel (%p1229) target = $region56
      $region55: #{tpu_custom_call.1} parent=5 // pred_region
        %s1232 = ssub.s32 %s16, 2
        // Predicated region
        $region57: #{tpu_custom_call.1} parent=55 // pred_check
          %p1233 = pneg %p197
        $region58: #{tpu_custom_call.1} parent=55 // pred_check_branch
          %1235 = sbr.rel (%p1233) target = $region60
        $region59: #{tpu_custom_call.1} parent=55 // pred_region
          %s1236 = sand.u32 %s182, 1
          %s1237 = scalar_lea.sflag [#allocation3], %s1236
          %s1238 = sand.u32 %s182, 1
          %s1239 = smul.addr %s1238, 256
          %s1240 = scalar_lea.vmem [#allocation2], %s1239
          %1241 = dma.done %s1237, 4096
        $region60: #{tpu_custom_call.1} parent=55 // pred_fallthru
          _
      $region56: #{tpu_custom_call.1} parent=5 // pred_fallthru
        _
    $region6: #{tpu_custom_call.1} parent=1 // loop_footer
      %s20 = sadd.s32 1, %s16
    $region7: #{tpu_custom_call.1} parent=1 // loop_footer_branch
      %15 = sbr.rel target = $region3
    $region8: #{tpu_custom_call.1} parent=1 // loop_exit
      _
    %1242 = vsyncpa [#allocation3], 1
    %s1243 = scalar_lea.sflag [#allocation3], 1
    %1244 = vsyncpa %s1243, 1

</llo_original>
